<compile_context>
chip_gen: v7x
topology: tpu7x:2x2x1
jax: 0.10.0
libtpu: 0.0.40
codegen_flags: <defaults>
</compile_context>

<pallas_src>
import jax
import jax.numpy as jnp
from jax.experimental import pallas as pl
from jax.experimental.pallas import tpu as pltpu

LANES = 128  # TPU vreg lane width; also the per-step batch-column tile.


def lr_kernel(idx_ref, w_ref, offsets_ref, bias_ref, out_ref):
    """idx_ref:     (F, R, 128) int32  raw per-field category indices
       w_ref:       (R, 128)    f32    embedding table (V<=128, zero-padded),
                                       replicated over the R sublane rows
       offsets_ref: (F,)        int32  per-field offsets (SMEM)
       bias_ref:    (1,)        f32    bias (SMEM)
       out_ref:     (R, 128)    f32    sigmoid(logits), batch dense on
                                       sublanes x lanes (full-lane stores)"""
    F = idx_ref.shape[0]
    R, C = out_ref.shape
    table = w_ref[...]                                   # (R, 128) f32
    vmax = table.shape[1] - 1

    # Bias folded into the accumulator init (SMEM scalar -> vector splat).
    acc = jnp.full((R, C), bias_ref[0], dtype=jnp.float32)

    # F is static & tiny: unrolled. Per field: a scalar offset add, a clamp and
    # one in-vreg lane gather -- O(F) work per output element.
    for f in range(F):
        gidx = idx_ref[f] + offsets_ref[f]               # (R, 128) int32
        # Clamp keeps padded-tail / out-of-range indices inside the table
        # (out-of-range reads the zero padding -> contributes 0; PyTorch's
        # Embedding would raise instead -- callers must pass valid indices).
        gidx = jnp.clip(gidx, 0, vmax)
        acc = acc + jnp.take_along_axis(table, gidx, axis=-1)

    out_ref[...] = jax.nn.sigmoid(acc)


def logistic_regression(x, weight, bias, offsets, *, tb=1024):
    """x: (B, F) int per-field indices; weight: (V, 1) f32; bias: (1,) f32;
       offsets: (F,) int. Returns (B,) f32 matching the PyTorch module."""
    B, F = x.shape
    V = weight.shape[0]
    assert tb % LANES == 0, "batch tile must be a multiple of 128 lanes"
    if V > LANES:
        # TODO(synk): large-V path (tile V on an "arbitrary" axis / DMA gather).
        raise NotImplementedError("vocabulary > 128 not supported by this kernel")

    r_blk = tb // LANES
    grid_b = pl.cdiv(B, tb)
    b_pad = grid_b * tb

    # Single fused relayout of the only large input: pad + transpose + reshape
    # to (F, B/128, 128) so the batch sits dense on sublanes x lanes in-kernel.
    x32 = x.astype(jnp.int32)
    if b_pad != B:
        x32 = jnp.pad(x32, ((0, b_pad - B), (0, 0)))
    idx = x32.T.reshape(F, b_pad // LANES, LANES)

    # Weight as a zero-padded, lane-resident row replicated over the r_blk
    # sublane rows the gather operates on (tiny: r_blk*128*4 bytes, resident).
    w_row = jnp.zeros((1, LANES), jnp.float32).at[0, :V].set(
        weight[:, 0].astype(jnp.float32))
    w_rows = jnp.broadcast_to(w_row, (r_blk, LANES))

    out = pl.pallas_call(
        lr_kernel,
        out_shape=jax.ShapeDtypeStruct((b_pad // LANES, LANES), jnp.float32),
        grid=(grid_b,),
        in_specs=[
            pl.BlockSpec((F, r_blk, LANES), lambda i: (0, i, 0)),   # indices
            pl.BlockSpec((r_blk, LANES), lambda i: (0, 0)),         # table
            pl.BlockSpec(memory_space=pltpu.MemorySpace.SMEM),      # offsets
            pl.BlockSpec(memory_space=pltpu.MemorySpace.SMEM),      # bias
        ],
        out_specs=pl.BlockSpec((r_blk, LANES), lambda i: (i, 0)),
        compiler_params=pltpu.CompilerParams(
            dimension_semantics=("parallel",)),
    )(idx, w_rows, offsets.astype(jnp.int32), bias.astype(jnp.float32))

    # (b_pad/128, 128) row-major == batch order; free reshape, drop padding.
    return out.reshape(-1)[:B]


if __name__ == "__main__":
    key = jax.random.PRNGKey(0)
    field_dims = (8, 8, 8, 8)            # V = 32 total categories
    B = 2000                             # ragged tail (pads to 2048) + 2-step grid
    F = len(field_dims)
    V = sum(field_dims)

    # Deterministic params (Embedding ~ N(0,1), bias = 0, like PyTorch init).
    k_w, k_x = jax.random.split(key)
    weight = jax.random.normal(k_w, (V, 1), dtype=jnp.float32)
    bias = jnp.zeros((1,), dtype=jnp.float32)

    # offsets = (0, *cumsum(field_dims)[:-1])
    offs, run = [], 0
    for d in field_dims:
        offs.append(run)
        run += d
    offsets = jnp.array(offs, dtype=jnp.int32)

    # Per-field category indices (PyTorch uses Long; int32 suffices on TPU).
    x = jax.random.randint(k_x, (B, F), 0, field_dims[0], dtype=jnp.int32)

    out = jax.block_until_ready(logistic_regression(x, weight, bias, offsets))

    # Pure-JAX reference for the same semantics.
    idx_ref = x + offsets[None, :]
    ref = jax.nn.sigmoid(jnp.sum(weight[idx_ref, 0], axis=1) + bias[0])

    assert out.shape == (B,), out.shape
    assert jnp.allclose(out, ref, atol=1e-5), (out, ref)
    print("KERNEL_OK")
</pallas_src>

<mosaic_0001>
module attributes {stable_mosaic.version = 11 : i64} {
  func.func @lr_kernel(%arg0: i32, %arg1: memref<4x8x128xi32, #tpu.memory_space<vmem>>, %arg2: memref<8x128xf32, #tpu.memory_space<vmem>>, %arg3: memref<4xi32, #tpu.memory_space<smem>>, %arg4: memref<1xf32, #tpu.memory_space<smem>>, %arg5: memref<8x128xf32, #tpu.memory_space<vmem>>) attributes {dimension_semantics = [#tpu.dimension_semantics<parallel>], iteration_bounds = array<i64: 2>, scalar_prefetch = 0 : i64, scratch_operands = 0 : i64, tpu.core_type = #tpu.core_type<tc>, window_params = [{transform_indices = @transform_0, window_bounds = array<i64: 4, 8, 128>}, {pipeline_mode = #tpu.pipeline_mode<synchronous>, transform_indices = @transform_1, window_bounds = array<i64: 8, 128>}, {transform_indices = @transform_2, window_bounds = array<i64: 4>}, {transform_indices = @transform_3, window_bounds = array<i64: 1>}, {transform_indices = @transform_4, window_bounds = array<i64: 8, 128>}]} {
    %c0 = arith.constant 0 : index
    %c0_0 = arith.constant 0 : index
    %0 = vector.load %arg2[%c0, %c0_0] : memref<8x128xf32, #tpu.memory_space<vmem>>, vector<8x128xf32>
    %c0_1 = arith.constant 0 : index
    %1 = memref.load %arg4[%c0_1] : memref<1xf32, #tpu.memory_space<smem>>
    %2 = vector.broadcast %1 : f32 to vector<8x128xf32>
    %c0_2 = arith.constant 0 : index
    %c0_3 = arith.constant 0 : index
    %c0_4 = arith.constant 0 : index
    %3 = vector.load %arg1[%c0_2, %c0_3, %c0_4] : memref<4x8x128xi32, #tpu.memory_space<vmem>>, vector<1x8x128xi32>
    %4 = vector.shape_cast %3 : vector<1x8x128xi32> to vector<8x128xi32>
    %c0_5 = arith.constant 0 : index
    %5 = memref.load %arg3[%c0_5] : memref<4xi32, #tpu.memory_space<smem>>
    %6 = vector.broadcast %5 : i32 to vector<8x128xi32>
    %7 = arith.addi %4, %6 : vector<8x128xi32>
    %c0_i32 = arith.constant 0 : i32
    %c127_i32 = arith.constant 127 : i32
    %8 = vector.broadcast %c0_i32 : i32 to vector<8x128xi32>
    %9 = arith.maxsi %8, %7 : vector<8x128xi32>
    %10 = vector.broadcast %c127_i32 : i32 to vector<8x128xi32>
    %11 = arith.minsi %10, %9 : vector<8x128xi32>
    %c0_i32_6 = arith.constant 0 : i32
    %12 = vector.broadcast %c0_i32_6 : i32 to vector<8x128xi32>
    %13 = arith.cmpi slt, %11, %12 : vector<8x128xi32>
    %c128_i32 = arith.constant 128 : i32
    %14 = vector.broadcast %c128_i32 : i32 to vector<8x128xi32>
    %15 = arith.addi %11, %14 : vector<8x128xi32>
    %16 = arith.select %13, %15, %11 : vector<8x128xi1>, vector<8x128xi32>
    %17 = vector.shape_cast %16 : vector<8x128xi32> to vector<8x128x1xi32>
    %18 = vector.shape_cast %17 : vector<8x128x1xi32> to vector<8x128xi32>
    %19 = tpu.dynamic_gather %0[%18] in [1] : vector<8x128xf32>, vector<8x128xi32> -> vector<8x128xf32>
    %20 = arith.addf %2, %19 : vector<8x128xf32>
    %c1 = arith.constant 1 : index
    %c0_7 = arith.constant 0 : index
    %c0_8 = arith.constant 0 : index
    %21 = vector.load %arg1[%c1, %c0_7, %c0_8] : memref<4x8x128xi32, #tpu.memory_space<vmem>>, vector<1x8x128xi32>
    %22 = vector.shape_cast %21 : vector<1x8x128xi32> to vector<8x128xi32>
    %c1_9 = arith.constant 1 : index
    %23 = memref.load %arg3[%c1_9] : memref<4xi32, #tpu.memory_space<smem>>
    %24 = vector.broadcast %23 : i32 to vector<8x128xi32>
    %25 = arith.addi %22, %24 : vector<8x128xi32>
    %c0_i32_10 = arith.constant 0 : i32
    %c127_i32_11 = arith.constant 127 : i32
    %26 = vector.broadcast %c0_i32_10 : i32 to vector<8x128xi32>
    %27 = arith.maxsi %26, %25 : vector<8x128xi32>
    %28 = vector.broadcast %c127_i32_11 : i32 to vector<8x128xi32>
    %29 = arith.minsi %28, %27 : vector<8x128xi32>
    %c0_i32_12 = arith.constant 0 : i32
    %30 = vector.broadcast %c0_i32_12 : i32 to vector<8x128xi32>
    %31 = arith.cmpi slt, %29, %30 : vector<8x128xi32>
    %c128_i32_13 = arith.constant 128 : i32
    %32 = vector.broadcast %c128_i32_13 : i32 to vector<8x128xi32>
    %33 = arith.addi %29, %32 : vector<8x128xi32>
    %34 = arith.select %31, %33, %29 : vector<8x128xi1>, vector<8x128xi32>
    %35 = vector.shape_cast %34 : vector<8x128xi32> to vector<8x128x1xi32>
    %36 = vector.shape_cast %35 : vector<8x128x1xi32> to vector<8x128xi32>
    %37 = tpu.dynamic_gather %0[%36] in [1] : vector<8x128xf32>, vector<8x128xi32> -> vector<8x128xf32>
    %38 = arith.addf %20, %37 : vector<8x128xf32>
    %c2 = arith.constant 2 : index
    %c0_14 = arith.constant 0 : index
    %c0_15 = arith.constant 0 : index
    %39 = vector.load %arg1[%c2, %c0_14, %c0_15] : memref<4x8x128xi32, #tpu.memory_space<vmem>>, vector<1x8x128xi32>
    %40 = vector.shape_cast %39 : vector<1x8x128xi32> to vector<8x128xi32>
    %c2_16 = arith.constant 2 : index
    %41 = memref.load %arg3[%c2_16] : memref<4xi32, #tpu.memory_space<smem>>
    %42 = vector.broadcast %41 : i32 to vector<8x128xi32>
    %43 = arith.addi %40, %42 : vector<8x128xi32>
    %c0_i32_17 = arith.constant 0 : i32
    %c127_i32_18 = arith.constant 127 : i32
    %44 = vector.broadcast %c0_i32_17 : i32 to vector<8x128xi32>
    %45 = arith.maxsi %44, %43 : vector<8x128xi32>
    %46 = vector.broadcast %c127_i32_18 : i32 to vector<8x128xi32>
    %47 = arith.minsi %46, %45 : vector<8x128xi32>
    %c0_i32_19 = arith.constant 0 : i32
    %48 = vector.broadcast %c0_i32_19 : i32 to vector<8x128xi32>
    %49 = arith.cmpi slt, %47, %48 : vector<8x128xi32>
    %c128_i32_20 = arith.constant 128 : i32
    %50 = vector.broadcast %c128_i32_20 : i32 to vector<8x128xi32>
    %51 = arith.addi %47, %50 : vector<8x128xi32>
    %52 = arith.select %49, %51, %47 : vector<8x128xi1>, vector<8x128xi32>
    %53 = vector.shape_cast %52 : vector<8x128xi32> to vector<8x128x1xi32>
    %54 = vector.shape_cast %53 : vector<8x128x1xi32> to vector<8x128xi32>
    %55 = tpu.dynamic_gather %0[%54] in [1] : vector<8x128xf32>, vector<8x128xi32> -> vector<8x128xf32>
    %56 = arith.addf %38, %55 : vector<8x128xf32>
    %c3 = arith.constant 3 : index
    %c0_21 = arith.constant 0 : index
    %c0_22 = arith.constant 0 : index
    %57 = vector.load %arg1[%c3, %c0_21, %c0_22] : memref<4x8x128xi32, #tpu.memory_space<vmem>>, vector<1x8x128xi32>
    %58 = vector.shape_cast %57 : vector<1x8x128xi32> to vector<8x128xi32>
    %c3_23 = arith.constant 3 : index
    %59 = memref.load %arg3[%c3_23] : memref<4xi32, #tpu.memory_space<smem>>
    %60 = vector.broadcast %59 : i32 to vector<8x128xi32>
    %61 = arith.addi %58, %60 : vector<8x128xi32>
    %c0_i32_24 = arith.constant 0 : i32
    %c127_i32_25 = arith.constant 127 : i32
    %62 = vector.broadcast %c0_i32_24 : i32 to vector<8x128xi32>
    %63 = arith.maxsi %62, %61 : vector<8x128xi32>
    %64 = vector.broadcast %c127_i32_25 : i32 to vector<8x128xi32>
    %65 = arith.minsi %64, %63 : vector<8x128xi32>
    %c0_i32_26 = arith.constant 0 : i32
    %66 = vector.broadcast %c0_i32_26 : i32 to vector<8x128xi32>
    %67 = arith.cmpi slt, %65, %66 : vector<8x128xi32>
    %c128_i32_27 = arith.constant 128 : i32
    %68 = vector.broadcast %c128_i32_27 : i32 to vector<8x128xi32>
    %69 = arith.addi %65, %68 : vector<8x128xi32>
    %70 = arith.select %67, %69, %65 : vector<8x128xi1>, vector<8x128xi32>
    %71 = vector.shape_cast %70 : vector<8x128xi32> to vector<8x128x1xi32>
    %72 = vector.shape_cast %71 : vector<8x128x1xi32> to vector<8x128xi32>
    %73 = tpu.dynamic_gather %0[%72] in [1] : vector<8x128xf32>, vector<8x128xi32> -> vector<8x128xf32>
    %74 = arith.addf %56, %73 : vector<8x128xf32>
    %75 = arith.negf %74 : vector<8x128xf32>
    %76 = math.exp %75 : vector<8x128xf32>
    %cst = arith.constant 1.000000e+00 : f32
    %77 = vector.broadcast %cst : f32 to vector<8x128xf32>
    %78 = arith.addf %77, %76 : vector<8x128xf32>
    %79 = arith.divf %77, %78 : vector<8x128xf32>
    %c0_28 = arith.constant 0 : index
    %c0_29 = arith.constant 0 : index
    %80 = vector.load %arg5[%c0_28, %c0_29] : memref<8x128xf32, #tpu.memory_space<vmem>>, vector<8x128xf32>
    tpu.vector_store %arg5[%c0_28, %c0_29], %79 {strides = array<i32>} : memref<8x128xf32, #tpu.memory_space<vmem>>, vector<8x128xf32>,
    return
  }
  func.func @transform_0(%arg0: i32) -> (i32, i32, i32) {
    %c0_i32 = arith.constant 0 : i32
    %c0_i32_0 = arith.constant 0 : i32
    %c0_i32_1 = arith.constant 0 : i32
    return %c0_i32, %arg0, %c0_i32_0 : i32, i32, i32
  }
  func.func @transform_1(%arg0: i32) -> (i32, i32) {
    %c0_i32 = arith.constant 0 : i32
    %c0_i32_0 = arith.constant 0 : i32
    %c0_i32_1 = arith.constant 0 : i32
    return %c0_i32, %c0_i32_0 : i32, i32
  }
  func.func @transform_2(%arg0: i32) -> i32 {
    %c0_i32 = arith.constant 0 : i32
    %c0_i32_0 = arith.constant 0 : i32
    return %c0_i32 : i32
  }
  func.func @transform_3(%arg0: i32) -> i32 {
    %c0_i32 = arith.constant 0 : i32
    %c0_i32_0 = arith.constant 0 : i32
    return %c0_i32 : i32
  }
  func.func @transform_4(%arg0: i32) -> (i32, i32) {
    %c0_i32 = arith.constant 0 : i32
    %c0_i32_0 = arith.constant 0 : i32
    return %arg0, %c0_i32 : i32, i32
  }
}

</mosaic_0001>

<llo_original>
// kernel: tpu_custom_call.1
$region0: #{tpu_custom_call.1}
  #allocation0 [shape = 'u32[]', space=smem, size = 0x4, offset = 0x4, fixed_abs, tag = 'smem constant byte address 0x4 - core index']
  #allocation1 [shape = 'u32[144,128]{1,0:T(1,128)}', space=vmem, size = 0x12000, scoped, tag = 'internal scratch']
  #allocation2 [shape = 'f32[1]{0:T(128)S(6)}', space=smem, size = 0x200, scoped, tag = 'scoped memory for tpu_custom_call.1']
  %s0 = inlined_call_operand.hbm [shape: s32[4,16,128], index: 0, kind: input, shape index: {}]
  %s1 = inlined_call_operand.hbm [shape: f32[8,128], index: 1, kind: input, shape index: {}]
  %s2 = inlined_call_operand.vmem [shape: s32[4], index: 2, kind: input, shape index: {}]
  %s3 = inlined_call_operand.<no memory space> [shape: f32[1], index: 3, kind: input, shape index: {}]
  %s4 = inlined_call_operand.hbm [shape: f32[16,128], index: 4, kind: output, shape index: {}]
  %s5 = sld [smem:[#allocation0]]
  $region61: #{tpu_custom_call.1} parent=0
    _
  %s7 = ssub.s32 1, %s5
  %s8 = scalar_select 0, %s7, %s5
  %9 = sst [smem:[#allocation2]] %s3
  $region1: #{tpu_custom_call.1} parent=0
    #allocation3 [shape = 'u8[32768]{0}', space=vmem, size = 0x8000, scoped, tag = 'input window, operand 0']
    #allocation4 [shape = 's32[2]{0}', space=sflag, size = 0x8, scoped, tag = 'scoped memory for tpu_custom_call.1']
    #allocation5 [shape = 's32[2]{0}', space=sflag, size = 0x8, scoped, tag = 'scoped memory for tpu_custom_call.1']
    #allocation6 [shape = 's32[2]{0}', space=sflag, size = 0x8, scoped, tag = 'scoped memory for tpu_custom_call.1']
    #allocation7 [shape = 'u8[4096]{0}', space=vmem, size = 0x1000, scoped, tag = 'input window, operand 1, single buffered']
    #allocation8 [shape = 's32[1]{0}', space=sflag, size = 0x4, scoped, tag = 'scoped memory for tpu_custom_call.1']
    #allocation9 [shape = 'u8[512]{0}', space=smem, size = 0x200, scoped, tag = 'input window, operand 2, single buffered']
    #allocation10 [shape = 'u8[8192]{0}', space=vmem, size = 0x2000, scoped, tag = 'output window, operand 0']
    %10 = vsyncpa [#allocation4], 0
    %s11 = scalar_lea.sflag [#allocation4], 1
    %12 = vsyncpa %s11, 0
    %13 = vsyncpa [#allocation8], 0
    %14 = vsyncpa [#allocation6], 0
    %15 = vsyncpa [#allocation5], 0
    %s16 = scalar_lea.sflag [#allocation5], 1
    %17 = vsyncpa %s16, 0
    loop: start=0, step=1, limit=4
    $region2: #{tpu_custom_call.1} parent=1 // loop_pre_header
      _
    $region3: #{tpu_custom_call.1} parent=1 // loop_header
      %s19 = sphi 0, %s23
      %p20 = scmp.ge.s32.totalorder %s19, 4
      %s29 = sphi 0, %s31
      %s32 = sphi 0, %s29
      %s33 = sphi 0, %s32
      %s49 = sphi 0, %s33
      %s53 = sphi 0, %s53
      %s55 = sphi 0, %s53
      %s56 = sphi 0, %s55
      %s70 = sphi 0, %s56
      %s74 = sphi 0, %s74
      %s76 = sphi 0, %s74
      %s77 = sphi 0, %s76
      %s91 = sphi 0, %s77
      %s95 = sphi 0, %s95
      %s97 = sphi 0, %s95
      %s98 = sphi 0, %s97
      %s112 = sphi 0, %s98
      %s118 = sphi 0, %s120
      %s121 = sphi 0, %s118
      %s122 = sphi 0, %s121
      %s138 = sphi 0, %s122
    $region4: #{tpu_custom_call.1} parent=1 // loop_header_branch
      %22 = sbr.rel (%p20) target = $region8
    $region5: #{tpu_custom_call.1} parent=1 // loop_body
      %s24 = ssub.s32 %s19, 1
      %s25 = ssub.s32 %s19, 2
      %s26 = sadd.s32 %s19, 1
      %s27 = ssub.s32 %s19, %s26
      %p28 = scmp.eq.s32.totalorder %s27, 0
      %s30 = sadd.s32 %s29, 1
      %s31 = scalar_select %p28, %s29, %s30
      %p34 = pneg %p28
      %p35 = scmp.eq.s32.totalorder %s19, 1
      %p36 = por %p34, %p35
      %p37 = scmp.ne.s32.totalorder %s29, %s32
      %p38 = scmp.eq.s32.totalorder %s19, 0
      %p39 = por %p37, %p38
      %p40 = scmp.ne.s32.totalorder %s29, %s32
      %p41 = scmp.eq.s32.totalorder %s24, 1
      %p42 = por %p40, %p41
      %p43 = scmp.ne.s32.totalorder %s32, %s33
      %p44 = scmp.eq.s32.totalorder %s24, 0
      %p45 = por %p43, %p44
      %p46 = scmp.ne.s32.totalorder %s32, %s33
      %p47 = scmp.eq.s32.totalorder %s25, 1
      %p48 = por %p46, %p47
      %p50 = scmp.ne.s32.totalorder %s33, %s49
      %p51 = scmp.eq.s32.totalorder %s25, 0
      %p52 = por %p50, %p51
      %s54 = sadd.s32 %s53, 1
      %p57 = scmp.eq.s32.totalorder %s19, 1
      %p58 = scmp.ne.s32.totalorder %s53, %s55
      %p59 = scmp.eq.s32.totalorder %s19, 0
      %p60 = por %p58, %p59
      %p61 = scmp.ne.s32.totalorder %s53, %s55
      %p62 = scmp.eq.s32.totalorder %s24, 1
      %p63 = por %p61, %p62
      %p64 = scmp.ne.s32.totalorder %s55, %s56
      %p65 = scmp.eq.s32.totalorder %s24, 0
      %p66 = por %p64, %p65
      %p67 = scmp.ne.s32.totalorder %s55, %s56
      %p68 = scmp.eq.s32.totalorder %s25, 1
      %p69 = por %p67, %p68
      %p71 = scmp.ne.s32.totalorder %s56, %s70
      %p72 = scmp.eq.s32.totalorder %s25, 0
      %p73 = por %p71, %p72
      %s75 = sadd.s32 %s74, 1
      %p78 = scmp.eq.s32.totalorder %s19, 1
      %p79 = scmp.ne.s32.totalorder %s74, %s76
      %p80 = scmp.eq.s32.totalorder %s19, 0
      %p81 = por %p79, %p80
      %p82 = scmp.ne.s32.totalorder %s74, %s76
      %p83 = scmp.eq.s32.totalorder %s24, 1
      %p84 = por %p82, %p83
      %p85 = scmp.ne.s32.totalorder %s76, %s77
      %p86 = scmp.eq.s32.totalorder %s24, 0
      %p87 = por %p85, %p86
      %p88 = scmp.ne.s32.totalorder %s76, %s77
      %p89 = scmp.eq.s32.totalorder %s25, 1
      %p90 = por %p88, %p89
      %p92 = scmp.ne.s32.totalorder %s77, %s91
      %p93 = scmp.eq.s32.totalorder %s25, 0
      %p94 = por %p92, %p93
      %s96 = sadd.s32 %s95, 1
      %p99 = scmp.eq.s32.totalorder %s19, 1
      %p100 = scmp.ne.s32.totalorder %s95, %s97
      %p101 = scmp.eq.s32.totalorder %s19, 0
      %p102 = por %p100, %p101
      %p103 = scmp.ne.s32.totalorder %s95, %s97
      %p104 = scmp.eq.s32.totalorder %s24, 1
      %p105 = por %p103, %p104
      %p106 = scmp.ne.s32.totalorder %s97, %s98
      %p107 = scmp.eq.s32.totalorder %s24, 0
      %p108 = por %p106, %p107
      %p109 = scmp.ne.s32.totalorder %s97, %s98
      %p110 = scmp.eq.s32.totalorder %s25, 1
      %p111 = por %p109, %p110
      %p113 = scmp.ne.s32.totalorder %s98, %s112
      %p114 = scmp.eq.s32.totalorder %s25, 0
      %p115 = por %p113, %p114
      %s116 = ssub.s32 %s19, %s26
      %p117 = scmp.eq.s32.totalorder %s116, 0
      %s119 = sadd.s32 %s118, 1
      %s120 = scalar_select %p117, %s118, %s119
      %p123 = pneg %p117
      %p124 = scmp.eq.s32.totalorder %s19, 1
      %p125 = por %p123, %p124
      %p126 = scmp.ne.s32.totalorder %s118, %s121
      %p127 = scmp.eq.s32.totalorder %s19, 0
      %p128 = por %p126, %p127
      %p129 = scmp.ne.s32.totalorder %s118, %s121
      %p130 = scmp.eq.s32.totalorder %s24, 1
      %p131 = por %p129, %p130
      %p132 = scmp.ne.s32.totalorder %s121, %s122
      %p133 = scmp.eq.s32.totalorder %s24, 0
      %p134 = por %p132, %p133
      %p135 = scmp.ne.s32.totalorder %s121, %s122
      %p136 = scmp.eq.s32.totalorder %s25, 1
      %p137 = por %p135, %p136
      %p139 = scmp.ne.s32.totalorder %s122, %s138
      %p140 = scmp.eq.s32.totalorder %s25, 0
      %p141 = por %p139, %p140
      %p142 = scmp.le.s32.totalorder 1, %s19
      %p143 = scmp.lt.s32.totalorder %s19, 3
      %p144 = pnand %p142, %p143
      %p145 = pneg %p144
      // Predicated region
      $region9: #{tpu_custom_call.1} parent=5 // pred_check
        _
      $region10: #{tpu_custom_call.1} parent=5 // pred_check_branch
        %147 = sbr.rel (%p144) target = $region12
      $region11: #{tpu_custom_call.1} parent=5 // pred_region
        %s148 = ssub.s32 %s19, 1
        // Predicated region
        $region13: #{tpu_custom_call.1} parent=11 // pred_check
          %p149 = pneg %p66
        $region14: #{tpu_custom_call.1} parent=11 // pred_check_branch
          %151 = sbr.rel (%p149) target = $region16
        $region15: #{tpu_custom_call.1} parent=11 // pred_region
          %s153 = ssub.s32 128, 128
          %154 = vsyncadd [#allocation8], %s153
          %s156 = sshll.u32 [#allocation7], 4
          %s157 = int_to_ptr.vmem [resolvable:$true] %s156
          %159 = dma.hbm_to_vmem [thread:$0]  %s1, 128, %s157, [#allocation8]
        $region16: #{tpu_custom_call.1} parent=11 // pred_fallthru
          _
        // Predicated region
        $region17: #{tpu_custom_call.1} parent=11 // pred_check
          %p160 = pneg %p87
        $region18: #{tpu_custom_call.1} parent=11 // pred_check_branch
          %162 = sbr.rel (%p160) target = $region20
        $region19: #{tpu_custom_call.1} parent=11 // pred_region
          %s164 = ssub.s32 16, 16
          %165 = vsyncadd [#allocation6], %s164
          %s167 = sshll.u32 %s2, 4
          %s168 = int_to_ptr.vmem [resolvable:$true] %s167
          %170 = dma.vmem_to_smem %s168, 16, [#allocation9], [#allocation6]
        $region20: #{tpu_custom_call.1} parent=11 // pred_fallthru
          _
        // Predicated region
        $region21: #{tpu_custom_call.1} parent=11 // pred_check
          %p171 = pneg %p108
        $region22: #{tpu_custom_call.1} parent=11 // pred_check_branch
          %173 = sbr.rel (%p171) target = $region24
        $region23: #{tpu_custom_call.1} parent=11 // pred_region
          _
        $region24: #{tpu_custom_call.1} parent=11 // pred_fallthru
          _
      $region12: #{tpu_custom_call.1} parent=5 // pred_fallthru
        _
      %p174 = scmp.lt.s32.totalorder %s19, 2
      // Predicated region
      $region25: #{tpu_custom_call.1} parent=5 // pred_check
        %p175 = pneg %p174
      $region26: #{tpu_custom_call.1} parent=5 // pred_check_branch
        %177 = sbr.rel (%p175) target = $region28
      $region27: #{tpu_custom_call.1} parent=5 // pred_region
        // Predicated region
        $region29: #{tpu_custom_call.1} parent=27 // pred_check
          %p178 = pneg %p39
        $region30: #{tpu_custom_call.1} parent=27 // pred_check_branch
          %180 = sbr.rel (%p178) target = $region32
        $region31: #{tpu_custom_call.1} parent=27 // pred_region
          %s181 = sand.u32 %s29, 1
          %s182 = scalar_lea.sflag [#allocation4], %s181
          %s183 = sand.u32 %s29, 1
          %s184 = smul.addr %s183, 32
          %s185 = scalar_lea.vmem [#allocation3], %s184
          %s187 = ssub.s32 512, 512
          %188 = vsyncadd %s182, %s187
          %s189 = smul.addr %s19, 128
          %s190 = scalar_lea.hbm %s0, %s189
          %s191 = sshll.u32 %s185, 4
          %s192 = int_to_ptr.vmem [resolvable:$true] %s191
          %197 = dma.hbm_to_vmem [thread:$0]  %s190, 512, %s192, %s182, 256, 128, 8
        $region32: #{tpu_custom_call.1} parent=27 // pred_fallthru
          _
      $region28: #{tpu_custom_call.1} parent=5 // pred_fallthru
        _
      %p198 = scmp.le.s32.totalorder 1, %s19
      %p199 = scmp.lt.s32.totalorder %s19, 3
      %p200 = pnand %p198, %p199
      %p201 = pneg %p200
      // Predicated region
      $region33: #{tpu_custom_call.1} parent=5 // pred_check
        _
      $region34: #{tpu_custom_call.1} parent=5 // pred_check_branch
        %203 = sbr.rel (%p200) target = $region36
      $region35: #{tpu_custom_call.1} parent=5 // pred_region
        %s204 = ssub.s32 %s19, 1
        %s205 = sand.u32 %s32, 1
        %s206 = scalar_lea.sflag [#allocation4], %s205
        %s207 = sand.u32 %s32, 1
        %s208 = smul.addr %s207, 32
        %s209 = scalar_lea.vmem [#allocation3], %s208
        // Predicated region
        $region37: #{tpu_custom_call.1} parent=35 // pred_check
          %p210 = pneg %p45
        $region38: #{tpu_custom_call.1} parent=35 // pred_check_branch
          %212 = sbr.rel (%p210) target = $region40
        $region39: #{tpu_custom_call.1} parent=35 // pred_region
          %213 = dma.done %s206, 512
        $region40: #{tpu_custom_call.1} parent=35 // pred_fallthru
          _
        // Predicated region
        $region41: #{tpu_custom_call.1} parent=35 // pred_check
          %p214 = pneg %p66
        $region42: #{tpu_custom_call.1} parent=35 // pred_check_branch
          %216 = sbr.rel (%p214) target = $region44
        $region43: #{tpu_custom_call.1} parent=35 // pred_region
          %217 = dma.done [#allocation8], 128
        $region44: #{tpu_custom_call.1} parent=35 // pred_fallthru
          _
        // Predicated region
        $region45: #{tpu_custom_call.1} parent=35 // pred_check
          %p218 = pneg %p87
        $region46: #{tpu_custom_call.1} parent=35 // pred_check_branch
          %220 = sbr.rel (%p218) target = $region48
        $region47: #{tpu_custom_call.1} parent=35 // pred_region
          %221 = dma.done [#allocation6], 16
        $region48: #{tpu_custom_call.1} parent=35 // pred_fallthru
          _
        %222 = sfence
        %s223 = sand.u32 %s32, 1
        %s224 = scalar_lea.sflag [#allocation4], %s223
        %s225 = sand.u32 %s32, 1
        %s226 = smul.addr %s225, 32
        %s227 = scalar_lea.vmem [#allocation3], %s226
        %p228 = pneg %p45
        %p229 = pneg %p42
        %p230 = pneg %p66
        %p231 = pneg %p63
        %p232 = pneg %p87
        %p233 = pneg %p84
        %p234 = pneg %p108
        %p235 = pneg %p105
        %p236 = pneg %p134
        %p237 = pneg %p131
        %s238 = sand.u32 %s121, 1
        %s239 = scalar_lea.sflag [#allocation5], %s238
        %s240 = sand.u32 %s121, 1
        %s241 = smul.addr %s240, 8
        %s242 = scalar_lea.vmem [#allocation10], %s241
        %v243 = vld [vmem:[#allocation7] sm:$0xff]
        %s244 = sld [smem:[#allocation2]]
        %v245 = vstv %s244
        %v246 = vld [vmem:[%s209] sm:$0xff]
        %s247 = sld [smem:[#allocation9]]
        %v248 = vstv %s247
        %v249 = vadd.s32 %v246, %v248
        %vm250 = vcmp.gt.s32.totalorder %v249, 0
        %v251 = vsel %vm250, %v249, 0
        %vm252 = vcmp.lt.s32.totalorder %v251, 127
        %v253 = vsel %vm252, %v251, 127
        %vm254 = vcmp.lt.s32.totalorder %v253, 0
        %v255 = vadd.s32 %v253, 128
        %v256 = vsel %vm254, %v255, %v253
        %257 = vset.pattern.permute.xlu0 %v256
        %258 = vperm.xlu0 %257, %v243
        %v259 = vpop.permute.xlu0 %258
        %v260 = vadd.f32 %v245, %v259
        %s261 = scalar_lea.vmem %s209, 8 [#allocation3]
        %v262 = vld [vmem:[%s261] sm:$0xff]
        %s263 = sld [smem:[#allocation9 + $0x1]]
        %v264 = vstv %s263
        %v265 = vadd.s32 %v262, %v264
        %vm266 = vcmp.gt.s32.totalorder %v265, 0
        %v267 = vsel %vm266, %v265, 0
        %vm268 = vcmp.lt.s32.totalorder %v267, 127
        %v269 = vsel %vm268, %v267, 127
        %vm270 = vcmp.lt.s32.totalorder %v269, 0
        %v271 = vadd.s32 %v269, 128
        %v272 = vsel %vm270, %v271, %v269
        %273 = vset.pattern.permute.xlu0 %v272
        %274 = vperm.xlu0 %273, %v243
        %v275 = vpop.permute.xlu0 %274
        %v276 = vadd.f32 %v260, %v275
        %s277 = scalar_lea.vmem %s209, 16 [#allocation3]
        %v278 = vld [vmem:[%s277] sm:$0xff]
        %s279 = sld [smem:[#allocation9 + $0x2]]
        %v280 = vstv %s279
        %v281 = vadd.s32 %v278, %v280
        %vm282 = vcmp.gt.s32.totalorder %v281, 0
        %v283 = vsel %vm282, %v281, 0
        %vm284 = vcmp.lt.s32.totalorder %v283, 127
        %v285 = vsel %vm284, %v283, 127
        %vm286 = vcmp.lt.s32.totalorder %v285, 0
        %v287 = vadd.s32 %v285, 128
        %v288 = vsel %vm286, %v287, %v285
        %289 = vset.pattern.permute.xlu0 %v288
        %290 = vperm.xlu0 %289, %v243
        %v291 = vpop.permute.xlu0 %290
        %v292 = vadd.f32 %v276, %v291
        %s293 = scalar_lea.vmem %s209, 24 [#allocation3]
        %v294 = vld [vmem:[%s293] sm:$0xff]
        %s295 = sld [smem:[#allocation9 + $0x3]]
        %v296 = vstv %s295
        %v297 = vadd.s32 %v294, %v296
        %vm298 = vcmp.gt.s32.totalorder %v297, 0
        %v299 = vsel %vm298, %v297, 0
        %vm300 = vcmp.lt.s32.totalorder %v299, 127
        %v301 = vsel %vm300, %v299, 127
        %vm302 = vcmp.lt.s32.totalorder %v301, 0
        %v303 = vadd.s32 %v301, 128
        %v304 = vsel %vm302, %v303, %v301
        %305 = vset.pattern.permute.xlu0 %v304
        %306 = vperm.xlu0 %305, %v243
        %v307 = vpop.permute.xlu0 %306
        %v308 = vadd.f32 %v292, %v307
        %v309 = vxor.u32 %v308, 2147483648
        %v310 = vmul.f32 %v309, 1.442695
        %v311 = vpow.pop %v310
        %v312 = vadd.f32 %v311, 1.0
        %v313 = vrcp.pop %v312
        %v314 = vmul.f32 1.0, %v313
        %315 = vst [vmem:[%s242] sm:$0xff] %v314
        %s316 = sand.u32 %s121, 1
        %s317 = scalar_lea.sflag [#allocation5], %s316
        %s318 = sand.u32 %s121, 1
        %s319 = smul.addr %s318, 8
        %s320 = scalar_lea.vmem [#allocation10], %s319
        // Predicated region
        $region49: #{tpu_custom_call.1} parent=35 // pred_check
          %p321 = pneg %p131
        $region50: #{tpu_custom_call.1} parent=35 // pred_check_branch
          %323 = sbr.rel (%p321) target = $region52
        $region51: #{tpu_custom_call.1} parent=35 // pred_region
          %s325 = ssub.s32 128, 128
          %326 = vsyncadd %s317, %s325
          %s327 = smul.addr %s24, 128
          %s328 = scalar_lea.hbm %s4, %s327
          %s330 = sshll.u32 %s320, 4
          %s331 = int_to_ptr.vmem [resolvable:$true] %s330
          %333 = dma.vmem_to_hbm [thread:$0]  %s331, 128, %s328, %s317
        $region52: #{tpu_custom_call.1} parent=35 // pred_fallthru
          _
      $region36: #{tpu_custom_call.1} parent=5 // pred_fallthru
        _
      %p334 = scmp.le.s32.totalorder 2, %s19
      // Predicated region
      $region53: #{tpu_custom_call.1} parent=5 // pred_check
        %p335 = pneg %p334
      $region54: #{tpu_custom_call.1} parent=5 // pred_check_branch
        %337 = sbr.rel (%p335) target = $region56
      $region55: #{tpu_custom_call.1} parent=5 // pred_region
        %s338 = ssub.s32 %s19, 2
        // Predicated region
        $region57: #{tpu_custom_call.1} parent=55 // pred_check
          %p339 = pneg %p137
        $region58: #{tpu_custom_call.1} parent=55 // pred_check_branch
          %341 = sbr.rel (%p339) target = $region60
        $region59: #{tpu_custom_call.1} parent=55 // pred_region
          %s342 = sand.u32 %s122, 1
          %s343 = scalar_lea.sflag [#allocation5], %s342
          %s344 = sand.u32 %s122, 1
          %s345 = smul.addr %s344, 8
          %s346 = scalar_lea.vmem [#allocation10], %s345
          %347 = dma.done %s343, 128
        $region60: #{tpu_custom_call.1} parent=55 // pred_fallthru
          _
      $region56: #{tpu_custom_call.1} parent=5 // pred_fallthru
        _
    $region6: #{tpu_custom_call.1} parent=1 // loop_footer
      %s23 = sadd.s32 1, %s19
    $region7: #{tpu_custom_call.1} parent=1 // loop_footer_branch
      %18 = sbr.rel target = $region3
    $region8: #{tpu_custom_call.1} parent=1 // loop_exit
      _
    %348 = vsyncpa [#allocation4], 1
    %s349 = scalar_lea.sflag [#allocation4], 1
    %350 = vsyncpa %s349, 1
    %351 = vsyncpa [#allocation8], 1
    %352 = vsyncpa [#allocation5], 1
    %s353 = scalar_lea.sflag [#allocation5], 1
    %354 = vsyncpa %s353, 1
    %355 = vsyncpa [#allocation6], 1
    %s356 = scalar_lea.sflag [#allocation6], 1
    %357 = vsyncpa %s356, 1

</llo_original>
